<compile_context>
chip_gen: v7x
topology: tpu7x:2x2x1
jax: 0.10.0
libtpu: 0.0.40
codegen_flags: <defaults>
</compile_context>

<pallas_src>
import jax
import jax.numpy as jnp
from jax.experimental import pallas as pl
from jax.experimental.pallas import tpu as pltpu


def _round_up(x, m):
    return ((x + m - 1) // m) * m


def _vmem_budget_bytes():
    """VMEM limit derived from the chip: ~5/8 of physical capacity.

    v7x (64 MiB) -> 40 MiB, v5e/v6e (128 MiB) -> 80 MiB.  Conservative default
    assumes the smallest VMEM (v7x) if the query fails.
    """
    cap = 64 * 1024 * 1024
    try:
        cap = int(pltpu.get_tpu_info().vmem_capacity_bytes)
    except Exception:
        pass
    return min(cap * 5 // 8, 100 * 1024 * 1024)


def _din_kernel(t_ref, h_ref, m_ref, w1a_ref, w1bp_ref, b1_ref, w2_ref, b2_ref,
                o_ref, zt_ref, acc_ref):
    """Per (batch-tile, L-chunk) grid step.

    Refs:
      t_ref    (TB, E)      target items            (matmul dtype)
      h_ref    (TB, Lc, E)  history chunk           (matmul dtype)
      m_ref    (TB, Lc)     mask chunk              (f32)
      w1a_ref  (E, H)       W1[t rows] + W1[diff rows]        (matmul dtype)
      w1bp_ref (2E, H)      [W1[h rows]-W1[diff rows] ; W1[prod rows]]
      b1_ref   (1, H)       f32
      w2_ref   (1, H)       second Linear weight as a lane row, f32
      b2_ref   (1, 1)       scalar bias in SMEM, f32
      o_ref    (TB, E)      output (written at the last L chunk)
      zt_ref   (TB, H)      f32 scratch: target contribution to Linear1
      acc_ref  (TB, E)      f32 scratch: output accumulator over L chunks
    """
    l_idx = pl.program_id(1)
    TB, Lc, E = h_ref.shape
    H = w1a_ref.shape[1]

    @pl.when(l_idx == 0)
    def _():
        # Target contribution hoisted out of the L dimension; stashed once.
        zt_ref[...] = jnp.dot(t_ref[...], w1a_ref[...],
                              preferred_element_type=jnp.float32)
        acc_ref[...] = jnp.zeros_like(acc_ref)

    h = h_ref[...]                              # (TB, Lc, E)   matmul dtype
    t = t_ref[...]                              # (TB, E)       matmul dtype
    th = t[:, None, :] * h                      # (TB, Lc, E)   matmul dtype

    # Fused split-weight form of Linear(concat([t, h, t-h, t*h], -1) @ W1):
    #   z = t@(W1_t+W1_d) + [h, t*h] @ [[W1_h - W1_d], [W1_p]] + b1
    h2d = h.reshape(TB * Lc, E)
    th2d = th.reshape(TB * Lc, E)
    hth = jnp.concatenate([h2d, th2d], axis=-1)                 # (TB*Lc, 2E)
    z = jnp.dot(hth, w1bp_ref[...],
                preferred_element_type=jnp.float32)             # (TB*Lc, H) f32
    z = z.reshape(TB, Lc, H) + zt_ref[...][:, None, :] + b1_ref[...]
    z = jnp.maximum(z, 0.0)                                     # (TB, Lc, H) f32

    # Second Linear (H -> 1) as a VPU multiply + cross-lane reduce.
    logits = jnp.sum(z * w2_ref[...], axis=-1) + b2_ref[0, 0]   # (TB, Lc) f32
    att = logits * m_ref[...]                                   # (TB, Lc) f32

    # Weighted partial sum over this L chunk (f32 accumulation; att is f32 so
    # the product promotes the bf16 history to f32).
    acc_ref[...] += jnp.sum(att[:, :, None] * h, axis=1)        # (TB, E) f32

    @pl.when(l_idx == pl.num_programs(1) - 1)
    def _():
        o_ref[...] = acc_ref[...].astype(o_ref.dtype)


def din_attention(target_item, history_sequence, mask, w1, b1, w2, b2,
                  *, block_b=512, block_l=512, matmul_dtype=jnp.bfloat16,
                  vmem_limit_bytes=None):
    """DIN attention forward.

    w1: (4E, H), b1: (H,)|(1,H), w2: (H,1)|(H,), b2: (1,)|(1,1).
    `matmul_dtype` controls the HBM streaming / MXU input dtype (bf16 default,
    f32 accumulation is always kept).  Output is f32.
    """
    B, L, E = history_sequence.shape
    H = w1.shape[1]
    assert w1.shape[0] == 4 * E

    f32 = jnp.float32
    md_bytes = jnp.dtype(matmul_dtype).itemsize

    # Streams: history / target in the matmul dtype, mask in f32.
    target_item = target_item.astype(matmul_dtype)
    history_sequence = history_sequence.astype(matmul_dtype)
    mask = mask.astype(f32)

    # Pre-combine W1 row blocks (concat order was [t, h, t-h, t*h]) and cast
    # the MXU operands once here (not per grid step).
    w1 = w1.astype(f32)
    w1a = (w1[0:E] + w1[2 * E:3 * E]).astype(matmul_dtype)        # multiplies t
    w1bp = jnp.concatenate(
        [w1[E:2 * E] - w1[2 * E:3 * E],                            # multiplies h
         w1[3 * E:4 * E]], axis=0).astype(matmul_dtype)            # multiplies t*h
    b1 = b1.astype(f32).reshape(1, H)
    w2_row = w2.astype(f32).reshape(1, H)
    b2 = b2.astype(f32).reshape(1, 1)

    # ---- L chunking (innermost "arbitrary" grid axis) ----
    if block_l is None:
        block_l = 512
    if L <= block_l or L < 128:
        lc = L                                   # single chunk, full-dim block
    else:
        lc = max(128, (block_l // 128) * 128)    # lane-dim constraint on mask
    Lp = _round_up(L, lc)
    n_l = Lp // lc

    # ---- VMEM budget & batch tile ----
    vmem_limit = (vmem_limit_bytes if vmem_limit_bytes is not None
                  else _vmem_budget_bytes())
    per_row = (2 * lc * E * md_bytes             # double-buffered history tile
               + 2 * lc * 4                      # double-buffered mask tile
               + 2 * E * md_bytes                # double-buffered target tile
               + 2 * E * 4                       # double-buffered output tile
               + (H + E) * 4                     # zt / acc scratch
               + lc * (6 * E * md_bytes + 8 * H))  # in-kernel temporaries (rough)
    max_tb = max(8, int((vmem_limit * 3 // 5) // per_row) // 8 * 8)

    if B >= 8:
        tb = max(8, (min(block_b, B) // 8) * 8)
        if B >= 16:
            # >= 2 batch blocks so the "parallel" axis shards across both TCs.
            tb = min(tb, _round_up(pl.cdiv(B, 2), 8))
        tb = max(8, min(tb, max_tb))
    else:
        tb = B
    n_b = pl.cdiv(B, tb)
    Bp = n_b * tb

    # ---- padding: padded mask entries are zero -> they contribute nothing ----
    if Bp != B or Lp != L:
        target_item = jnp.pad(target_item, ((0, Bp - B), (0, 0)))
        history_sequence = jnp.pad(history_sequence,
                                   ((0, Bp - B), (0, Lp - L), (0, 0)))
        mask = jnp.pad(mask, ((0, Bp - B), (0, Lp - L)))

    flops = int(2 * Bp * E * H                    # zt (once per batch row)
                + 2 * Bp * Lp * (2 * E) * H       # fused [h, t*h] @ W1bp
                + Bp * Lp * E                     # t*h
                + 2 * Bp * Lp * H                 # H->1 multiply + reduce
                + 3 * Bp * Lp * E)                # mask + weighted L-sum
    bytes_accessed = int(md_bytes * (Bp * E + Bp * Lp * E + 3 * E * H)
                         + 4 * (Bp * Lp + 2 * H + 1 + Bp * E))

    grid_spec = pltpu.PrefetchScalarGridSpec(
        num_scalar_prefetch=0,
        grid=(n_b, n_l),
        in_specs=[
            pl.BlockSpec((tb, E), lambda i, l: (i, 0)),           # target
            pl.BlockSpec((tb, lc, E), lambda i, l: (i, l, 0)),    # history chunk
            pl.BlockSpec((tb, lc), lambda i, l: (i, l)),          # mask chunk
            pl.BlockSpec((E, H), lambda i, l: (0, 0)),            # w1a
            pl.BlockSpec((2 * E, H), lambda i, l: (0, 0)),        # w1bp
            pl.BlockSpec((1, H), lambda i, l: (0, 0)),            # b1
            pl.BlockSpec((1, H), lambda i, l: (0, 0)),            # w2 row
            pl.BlockSpec((1, 1), lambda i, l: (0, 0),             # b2 scalar
                         memory_space=pltpu.MemorySpace.SMEM),
        ],
        out_specs=pl.BlockSpec((tb, E), lambda i, l: (i, 0)),
        scratch_shapes=[pltpu.VMEM((tb, H), jnp.float32),   # zt stash
                        pltpu.VMEM((tb, E), jnp.float32)],  # output accumulator
    )

    out = pl.pallas_call(
        _din_kernel,
        out_shape=jax.ShapeDtypeStruct((Bp, E), jnp.float32),
        grid_spec=grid_spec,
        compiler_params=pltpu.CompilerParams(
            dimension_semantics=("parallel", "arbitrary"),
            vmem_limit_bytes=int(vmem_limit),
        ),
        cost_estimate=pl.CostEstimate(flops=flops, transcendentals=0,
                                      bytes_accessed=bytes_accessed),
    )(target_item, history_sequence, mask, w1a, w1bp, b1, w2_row, b2)

    return out[:B]


def reference(target_item, history_sequence, mask, w1, b1, w2, b2):
    B, L, E = history_sequence.shape
    t = jnp.broadcast_to(target_item[:, None, :], (B, L, E))
    h = history_sequence
    feat = jnp.concatenate([t, h, t - h, t * h], axis=-1).reshape(B * L, 4 * E)
    z = jnp.maximum(feat @ w1 + b1.reshape(1, -1), 0.0)
    att = (z @ w2 + b2.reshape(1, 1)).reshape(B, L) * mask
    return jnp.sum(att[:, :, None] * h, axis=1)


if __name__ == "__main__":
    def run_case(name, B, L, E, H, **kw):
        key = jax.random.PRNGKey(0)
        k_t, k_h, k_m, k_w1, k_b1, k_w2, k_b2 = jax.random.split(key, 7)
        target = jax.random.normal(k_t, (B, E), dtype=jnp.float32)
        history = jax.random.normal(k_h, (B, L, E), dtype=jnp.float32)
        mask = jax.random.bernoulli(k_m, 0.7, (B, L)).astype(jnp.float32)
        w1 = jax.random.normal(k_w1, (4 * E, H), dtype=jnp.float32) * 0.05
        b1 = jax.random.normal(k_b1, (1, H), dtype=jnp.float32) * 0.05
        w2 = jax.random.normal(k_w2, (H, 1), dtype=jnp.float32) * 0.05
        b2 = jax.random.normal(k_b2, (1, 1), dtype=jnp.float32) * 0.05

        ref = reference(target, history, mask, w1, b1, w2, b2)

        # f32 streaming/matmul path: tight numerical check.
        out32 = jax.block_until_ready(
            din_attention(target, history, mask, w1, b1, w2, b2,
                          matmul_dtype=jnp.float32, **kw))
        assert out32.shape == (B, E)
        assert jnp.allclose(out32, ref, atol=1e-4, rtol=1e-4), \
            f"{name}: f32 mismatch vs reference"

        # Default bf16 streaming/matmul path: loose check (bf16 rounding).
        outbf = jax.block_until_ready(
            din_attention(target, history, mask, w1, b1, w2, b2, **kw))
        assert outbf.shape == (B, E)
        err = float(jnp.max(jnp.abs(outbf - ref)) /
                    (jnp.max(jnp.abs(ref)) + 1e-6))
        assert err < 5e-2, f"{name}: bf16 error too large ({err})"

    # Small shapes consistent with the module (embedding_dim=32, units=[32]).
    # B=16 -> the batch grid auto-splits into 2 blocks of 8 ("parallel" axis).
    run_case("short_history", B=16, L=8, E=32, H=32)
    # Exercises the L-chunk ("arbitrary") grid axis: 2 chunks of 128.
    run_case("chunked_history", B=16, L=256, E=32, H=32, block_l=128)

    print("KERNEL_OK")
</pallas_src>

<mosaic_0001>
module attributes {stable_mosaic.version = 11 : i64} {
  func.func @_din_kernel(%arg0: i32, %arg1: i32, %arg2: memref<8x32xf32, #tpu.memory_space<vmem>>, %arg3: memref<8x8x32xf32, #tpu.memory_space<vmem>>, %arg4: memref<8x8xf32, #tpu.memory_space<vmem>>, %arg5: memref<32x32xf32, #tpu.memory_space<vmem>>, %arg6: memref<64x32xf32, #tpu.memory_space<vmem>>, %arg7: memref<1x32xf32, #tpu.memory_space<vmem>>, %arg8: memref<1x32xf32, #tpu.memory_space<vmem>>, %arg9: memref<1x1xf32, #tpu.memory_space<smem>>, %arg10: memref<8x32xf32, #tpu.memory_space<vmem>>, %arg11: memref<8x32xf32, #tpu.memory_space<vmem>>, %arg12: memref<8x32xf32, #tpu.memory_space<vmem>>) attributes {dimension_semantics = [#tpu.dimension_semantics<parallel>, #tpu.dimension_semantics<arbitrary>], iteration_bounds = array<i64: 2, 1>, scalar_prefetch = 0 : i64, scratch_operands = 2 : i64, tpu.core_type = #tpu.core_type<tc>, window_params = [{transform_indices = @transform_0, window_bounds = array<i64: 8, 32>}, {transform_indices = @transform_1, window_bounds = array<i64: 8, 8, 32>}, {transform_indices = @transform_2, window_bounds = array<i64: 8, 8>}, {pipeline_mode = #tpu.pipeline_mode<synchronous>, transform_indices = @transform_3, window_bounds = array<i64: 32, 32>}, {pipeline_mode = #tpu.pipeline_mode<synchronous>, transform_indices = @transform_4, window_bounds = array<i64: 64, 32>}, {pipeline_mode = #tpu.pipeline_mode<synchronous>, transform_indices = @transform_5, window_bounds = array<i64: 1, 32>}, {pipeline_mode = #tpu.pipeline_mode<synchronous>, transform_indices = @transform_6, window_bounds = array<i64: 1, 32>}, {transform_indices = @transform_7, window_bounds = array<i64: 1, 1>}, {transform_indices = @transform_8, window_bounds = array<i64: 8, 32>}]} {
    %c0_i32 = arith.constant 0 : i32
    %0 = arith.cmpi eq, %arg1, %c0_i32 : i32
    %1 = arith.extui %0 : i1 to i32
    %c0_i32_0 = arith.constant 0 : i32
    %2 = arith.cmpi ne, %1, %c0_i32_0 : i32
    scf.if %2 {
      %c0_26 = arith.constant 0 : index
      %c0_27 = arith.constant 0 : index
      %44 = vector.load %arg2[%c0_26, %c0_27] : memref<8x32xf32, #tpu.memory_space<vmem>>, vector<8x32xf32>
      %c0_28 = arith.constant 0 : index
      %c0_29 = arith.constant 0 : index
      %45 = vector.load %arg5[%c0_28, %c0_29] : memref<32x32xf32, #tpu.memory_space<vmem>>, vector<32x32xf32>
      %cst_30 = arith.constant dense<0.000000e+00> : vector<8x32xf32>
      %46 = tpu.matmul %44, %45, %cst_30 {dimension_numbers = #tpu.dot_dimension_numbers<[1], [0], [0], [1], [0, 0, 1, 1], [], []>} : vector<8x32xf32>, vector<32x32xf32>, vector<8x32xf32> -> vector<8x32xf32>
      %c0_31 = arith.constant 0 : index
      %c0_32 = arith.constant 0 : index
      %47 = vector.load %arg11[%c0_31, %c0_32] : memref<8x32xf32, #tpu.memory_space<vmem>>, vector<8x32xf32>
      tpu.vector_store %arg11[%c0_31, %c0_32], %46 {strides = array<i32>} : memref<8x32xf32, #tpu.memory_space<vmem>>, vector<8x32xf32>,
      %cst_33 = arith.constant 0.000000e+00 : f32
      %48 = vector.broadcast %cst_33 : f32 to vector<8x32xf32>
      %c0_34 = arith.constant 0 : index
      %c0_35 = arith.constant 0 : index
      %49 = vector.load %arg12[%c0_34, %c0_35] : memref<8x32xf32, #tpu.memory_space<vmem>>, vector<8x32xf32>
      tpu.vector_store %arg12[%c0_34, %c0_35], %48 {strides = array<i32>} : memref<8x32xf32, #tpu.memory_space<vmem>>, vector<8x32xf32>,
    } else {
    }
    %c0 = arith.constant 0 : index
    %c0_1 = arith.constant 0 : index
    %c0_2 = arith.constant 0 : index
    %3 = vector.load %arg3[%c0, %c0_1, %c0_2] : memref<8x8x32xf32, #tpu.memory_space<vmem>>, vector<8x8x32xf32>
    %c0_3 = arith.constant 0 : index
    %c0_4 = arith.constant 0 : index
    %4 = vector.load %arg2[%c0_3, %c0_4] : memref<8x32xf32, #tpu.memory_space<vmem>>, vector<8x32xf32>
    %5 = vector.shape_cast %4 : vector<8x32xf32> to vector<8x1x32xf32>
    %6 = vector.broadcast %5 : vector<8x1x32xf32> to vector<8x8x32xf32>
    %7 = arith.mulf %6, %3 : vector<8x8x32xf32>
    %8 = vector.shape_cast %3 : vector<8x8x32xf32> to vector<64x32xf32>
    %9 = vector.shape_cast %7 : vector<8x8x32xf32> to vector<64x32xf32>
    %10 = tpu.concatenate %8, %9 in 1 : vector<64x32xf32>, vector<64x32xf32> -> vector<64x64xf32>
    %c0_5 = arith.constant 0 : index
    %c0_6 = arith.constant 0 : index
    %11 = vector.load %arg6[%c0_5, %c0_6] : memref<64x32xf32, #tpu.memory_space<vmem>>, vector<64x32xf32>
    %cst = arith.constant dense<0.000000e+00> : vector<64x32xf32>
    %12 = tpu.matmul %10, %11, %cst {dimension_numbers = #tpu.dot_dimension_numbers<[1], [0], [0], [1], [0, 0, 1, 1], [], []>} : vector<64x64xf32>, vector<64x32xf32>, vector<64x32xf32> -> vector<64x32xf32>
    %13 = vector.shape_cast %12 : vector<64x32xf32> to vector<8x8x32xf32>
    %c0_7 = arith.constant 0 : index
    %c0_8 = arith.constant 0 : index
    %14 = vector.load %arg11[%c0_7, %c0_8] : memref<8x32xf32, #tpu.memory_space<vmem>>, vector<8x32xf32>
    %15 = vector.shape_cast %14 : vector<8x32xf32> to vector<8x1x32xf32>
    %16 = vector.broadcast %15 : vector<8x1x32xf32> to vector<8x8x32xf32>
    %17 = arith.addf %13, %16 : vector<8x8x32xf32>
    %c0_9 = arith.constant 0 : index
    %c0_10 = arith.constant 0 : index
    %18 = vector.load %arg7[%c0_9, %c0_10] : memref<1x32xf32, #tpu.memory_space<vmem>>, vector<1x32xf32>
    %19 = vector.shape_cast %18 : vector<1x32xf32> to vector<1x1x32xf32>
    %20 = vector.broadcast %19 : vector<1x1x32xf32> to vector<8x8x32xf32>
    %21 = arith.addf %17, %20 : vector<8x8x32xf32>
    %cst_11 = arith.constant 0.000000e+00 : f32
    %22 = vector.broadcast %cst_11 : f32 to vector<8x8x32xf32>
    %23 = arith.maximumf %21, %22 : vector<8x8x32xf32>
    %c0_12 = arith.constant 0 : index
    %c0_13 = arith.constant 0 : index
    %24 = vector.load %arg8[%c0_12, %c0_13] : memref<1x32xf32, #tpu.memory_space<vmem>>, vector<1x32xf32>
    %25 = vector.shape_cast %24 : vector<1x32xf32> to vector<1x1x32xf32>
    %26 = vector.broadcast %25 : vector<1x1x32xf32> to vector<8x8x32xf32>
    %27 = arith.mulf %23, %26 : vector<8x8x32xf32>
    %cst_14 = arith.constant dense<0.000000e+00> : vector<8x8xf32>
    %28 = vector.multi_reduction <add>, %27, %cst_14 [2] : vector<8x8x32xf32> to vector<8x8xf32>
    %c0_15 = arith.constant 0 : index
    %c0_16 = arith.constant 0 : index
    %29 = memref.load %arg9[%c0_15, %c0_16] : memref<1x1xf32, #tpu.memory_space<smem>>
    %30 = vector.broadcast %29 : f32 to vector<8x8xf32>
    %31 = arith.addf %28, %30 : vector<8x8xf32>
    %c0_17 = arith.constant 0 : index
    %c0_18 = arith.constant 0 : index
    %32 = vector.load %arg4[%c0_17, %c0_18] : memref<8x8xf32, #tpu.memory_space<vmem>>, vector<8x8xf32>
    %33 = arith.mulf %31, %32 : vector<8x8xf32>
    %c0_19 = arith.constant 0 : index
    %c0_20 = arith.constant 0 : index
    %34 = vector.load %arg12[%c0_19, %c0_20] : memref<8x32xf32, #tpu.memory_space<vmem>>, vector<8x32xf32>
    %35 = vector.shape_cast %33 : vector<8x8xf32> to vector<8x8x1xf32>
    %36 = vector.broadcast %35 : vector<8x8x1xf32> to vector<8x8x32xf32>
    %37 = arith.mulf %36, %3 : vector<8x8x32xf32>
    %cst_21 = arith.constant dense<0.000000e+00> : vector<8x32xf32>
    %38 = vector.multi_reduction <add>, %37, %cst_21 [1] : vector<8x8x32xf32> to vector<8x32xf32>
    %39 = arith.addf %34, %38 : vector<8x32xf32>
    %c0_22 = arith.constant 0 : index
    %c0_23 = arith.constant 0 : index
    %40 = vector.load %arg12[%c0_22, %c0_23] : memref<8x32xf32, #tpu.memory_space<vmem>>, vector<8x32xf32>
    tpu.vector_store %arg12[%c0_22, %c0_23], %39 {strides = array<i32>} : memref<8x32xf32, #tpu.memory_space<vmem>>, vector<8x32xf32>,
    %c0_i32_24 = arith.constant 0 : i32
    %41 = arith.cmpi eq, %arg1, %c0_i32_24 : i32
    %42 = arith.extui %41 : i1 to i32
    %c0_i32_25 = arith.constant 0 : i32
    %43 = arith.cmpi ne, %42, %c0_i32_25 : i32
    scf.if %43 {
      %c0_26 = arith.constant 0 : index
      %c0_27 = arith.constant 0 : index
      %44 = vector.load %arg12[%c0_26, %c0_27] : memref<8x32xf32, #tpu.memory_space<vmem>>, vector<8x32xf32>
      %c0_28 = arith.constant 0 : index
      %c0_29 = arith.constant 0 : index
      %45 = vector.load %arg10[%c0_28, %c0_29] : memref<8x32xf32, #tpu.memory_space<vmem>>, vector<8x32xf32>
      tpu.vector_store %arg10[%c0_28, %c0_29], %44 {strides = array<i32>} : memref<8x32xf32, #tpu.memory_space<vmem>>, vector<8x32xf32>,
    } else {
    }
    return
  }
  func.func @transform_0(%arg0: i32, %arg1: i32) -> (i32, i32) {
    %c0_i32 = arith.constant 0 : i32
    %c0_i32_0 = arith.constant 0 : i32
    return %arg0, %c0_i32 : i32, i32
  }
  func.func @transform_1(%arg0: i32, %arg1: i32) -> (i32, i32, i32) {
    %c0_i32 = arith.constant 0 : i32
    %c0_i32_0 = arith.constant 0 : i32
    return %arg0, %arg1, %c0_i32 : i32, i32, i32
  }
  func.func @transform_2(%arg0: i32, %arg1: i32) -> (i32, i32) {
    %c0_i32 = arith.constant 0 : i32
    return %arg0, %arg1 : i32, i32
  }
  func.func @transform_3(%arg0: i32, %arg1: i32) -> (i32, i32) {
    %c0_i32 = arith.constant 0 : i32
    %c0_i32_0 = arith.constant 0 : i32
    %c0_i32_1 = arith.constant 0 : i32
    return %c0_i32, %c0_i32_0 : i32, i32
  }
  func.func @transform_4(%arg0: i32, %arg1: i32) -> (i32, i32) {
    %c0_i32 = arith.constant 0 : i32
    %c0_i32_0 = arith.constant 0 : i32
    %c0_i32_1 = arith.constant 0 : i32
    return %c0_i32, %c0_i32_0 : i32, i32
  }
  func.func @transform_5(%arg0: i32, %arg1: i32) -> (i32, i32) {
    %c0_i32 = arith.constant 0 : i32
    %c0_i32_0 = arith.constant 0 : i32
    %c0_i32_1 = arith.constant 0 : i32
    return %c0_i32, %c0_i32_0 : i32, i32
  }
  func.func @transform_6(%arg0: i32, %arg1: i32) -> (i32, i32) {
    %c0_i32 = arith.constant 0 : i32
    %c0_i32_0 = arith.constant 0 : i32
    %c0_i32_1 = arith.constant 0 : i32
    return %c0_i32, %c0_i32_0 : i32, i32
  }
  func.func @transform_7(%arg0: i32, %arg1: i32) -> (i32, i32) {
    %c0_i32 = arith.constant 0 : i32
    %c0_i32_0 = arith.constant 0 : i32
    %c0_i32_1 = arith.constant 0 : i32
    return %c0_i32, %c0_i32_0 : i32, i32
  }
  func.func @transform_8(%arg0: i32, %arg1: i32) -> (i32, i32) {
    %c0_i32 = arith.constant 0 : i32
    %c0_i32_0 = arith.constant 0 : i32
    return %arg0, %c0_i32 : i32, i32
  }
}

</mosaic_0001>

<llo_original>
// kernel: tpu_custom_call.1
$region0: #{tpu_custom_call.1}
  #allocation0 [shape = 'u32[]', space=smem, size = 0x4, offset = 0x4, fixed_abs, tag = 'smem constant byte address 0x4 - core index']
  #allocation1 [shape = 'u32[144,128]{1,0:T(1,128)}', space=vmem, size = 0x12000, scoped, tag = 'internal scratch']
  #allocation2 [shape = 'f32[8,32]{1,0:T(8,128)}', space=vmem, size = 0x1000, scoped, tag = 'scratch operand']
  #allocation3 [shape = 'f32[8,32]{1,0:T(8,128)}', space=vmem, size = 0x1000, scoped, tag = 'scratch operand']
  #allocation4 [shape = 'f32[1,1]{1,0:T(1,128)S(6)}', space=smem, size = 0x200, scoped, tag = 'scoped memory for tpu_custom_call.1']
  %s0 = inlined_call_operand.vmem [shape: f32[16,32], index: 0, kind: input, shape index: {}]
  %s1 = inlined_call_operand.hbm [shape: f32[16,8,32], index: 1, kind: input, shape index: {}]
  %s2 = inlined_call_operand.vmem [shape: f32[16,8], index: 2, kind: input, shape index: {}]
  %s3 = inlined_call_operand.vmem [shape: f32[32,32], index: 3, kind: input, shape index: {}]
  %s4 = inlined_call_operand.vmem [shape: f32[64,32], index: 4, kind: input, shape index: {}]
  %s5 = inlined_call_operand.vmem [shape: f32[1,32], index: 5, kind: input, shape index: {}]
  %s6 = inlined_call_operand.vmem [shape: f32[1,32], index: 6, kind: input, shape index: {}]
  %s7 = inlined_call_operand.<no memory space> [shape: f32[1,1], index: 7, kind: input, shape index: {}]
  %s8 = inlined_call_operand.hbm [shape: f32[16,32], index: 8, kind: output, shape index: {}]
  %s9 = sld [smem:[#allocation0]]
  $region77: #{tpu_custom_call.1} parent=0
    _
  %s11 = ssub.s32 1, %s9
  %s12 = scalar_select 0, %s11, %s9
  %13 = sst [smem:[#allocation4]] %s7
  $region1: #{tpu_custom_call.1} parent=0
    #allocation5 [shape = 'u8[65536]{0}', space=vmem, size = 0x10000, scoped, tag = 'input window, operand 1']
    #allocation6 [shape = 's32[2]{0}', space=sflag, size = 0x8, scoped, tag = 'scoped memory for tpu_custom_call.1']
    #allocation7 [shape = 's32[2]{0}', space=sflag, size = 0x8, scoped, tag = 'scoped memory for tpu_custom_call.1']
    #allocation8 [shape = 'u8[8192]{0}', space=vmem, size = 0x2000, scoped, tag = 'output window, operand 0']
    %14 = vsyncpa [#allocation6], 0
    %s15 = scalar_lea.sflag [#allocation6], 1
    %16 = vsyncpa %s15, 0
    %17 = vsyncpa [#allocation7], 0
    %s18 = scalar_lea.sflag [#allocation7], 1
    %19 = vsyncpa %s18, 0
    loop: start=0, step=1, limit=4
    $region2: #{tpu_custom_call.1} parent=1 // loop_pre_header
      _
    $region3: #{tpu_custom_call.1} parent=1 // loop_header
      %s21 = sphi 0, %s25
      %p22 = scmp.ge.s32.totalorder %s21, 4
      %s28 = sphi 0, %s40
      %s29 = sphi 0, %s36
      %s30 = sphi 0, %s28
      %s31 = sphi 0, %s29
      %s32 = sphi 0, %s30
      %s33 = sphi 0, %s31
      %s43 = sphi 0, %s45
      %s46 = sphi 0, %s43
      %s47 = sphi 0, %s46
      %s63 = sphi 0, %s47
      %s71 = sphi 0, %s73
      %s74 = sphi 0, %s71
      %s75 = sphi 0, %s74
      %s91 = sphi 0, %s75
      %s99 = sphi 0, %s101
      %s102 = sphi 0, %s99
      %s103 = sphi 0, %s102
      %s119 = sphi 0, %s103
      %s123 = sphi 0, %s123
      %s125 = sphi 0, %s123
      %s126 = sphi 0, %s125
      %s140 = sphi 0, %s126
      %s144 = sphi 0, %s144
      %s146 = sphi 0, %s144
      %s147 = sphi 0, %s146
      %s161 = sphi 0, %s147
      %s165 = sphi 0, %s165
      %s167 = sphi 0, %s165
      %s168 = sphi 0, %s167
      %s182 = sphi 0, %s168
      %s186 = sphi 0, %s186
      %s188 = sphi 0, %s186
      %s189 = sphi 0, %s188
      %s203 = sphi 0, %s189
      %s207 = sphi 0, %s207
      %s209 = sphi 0, %s207
      %s210 = sphi 0, %s209
      %s224 = sphi 0, %s210
      %s230 = sphi 0, %s232
      %s233 = sphi 0, %s230
      %s234 = sphi 0, %s233
      %s250 = sphi 0, %s234
    $region4: #{tpu_custom_call.1} parent=1 // loop_header_branch
      %24 = sbr.rel (%p22) target = $region8
    $region5: #{tpu_custom_call.1} parent=1 // loop_body
      %s26 = ssub.s32 %s21, 1
      %s27 = ssub.s32 %s21, 2
      %s34 = sadd.s32 1, %s29
      %p35 = scmp.ge.s32.totalorder %s34, 1
      %s36 = scalar_select %p35, 0, %s34
      %s37 = sadd.s32 1, %s28
      %s38 = scalar_select %p35, %s37, %s28
      %p39 = scmp.ge.s32.totalorder %s38, 2
      %s40 = scalar_select %p39, 0, %s38
      %s41 = ssub.s32 %s28, %s40
      %p42 = scmp.eq.s32.totalorder %s41, 0
      %s44 = sadd.s32 %s43, 1
      %s45 = scalar_select %p42, %s43, %s44
      %p48 = pneg %p42
      %p49 = scmp.eq.s32.totalorder %s21, 1
      %p50 = por %p48, %p49
      %p51 = scmp.ne.s32.totalorder %s43, %s46
      %p52 = scmp.eq.s32.totalorder %s21, 0
      %p53 = por %p51, %p52
      %p54 = scmp.ne.s32.totalorder %s43, %s46
      %p55 = scmp.eq.s32.totalorder %s26, 1
      %p56 = por %p54, %p55
      %p57 = scmp.ne.s32.totalorder %s46, %s47
      %p58 = scmp.eq.s32.totalorder %s26, 0
      %p59 = por %p57, %p58
      %p60 = scmp.ne.s32.totalorder %s46, %s47
      %p61 = scmp.eq.s32.totalorder %s27, 1
      %p62 = por %p60, %p61
      %p64 = scmp.ne.s32.totalorder %s47, %s63
      %p65 = scmp.eq.s32.totalorder %s27, 0
      %p66 = por %p64, %p65
      %s67 = ssub.s32 %s28, %s40
      %s68 = ssub.s32 %s29, %s36
      %s69 = sor.u32 %s67, %s68
      %p70 = scmp.eq.s32.totalorder %s69, 0
      %s72 = sadd.s32 %s71, 1
      %s73 = scalar_select %p70, %s71, %s72
      %p76 = pneg %p70
      %p77 = scmp.eq.s32.totalorder %s21, 1
      %p78 = por %p76, %p77
      %p79 = scmp.ne.s32.totalorder %s71, %s74
      %p80 = scmp.eq.s32.totalorder %s21, 0
      %p81 = por %p79, %p80
      %p82 = scmp.ne.s32.totalorder %s71, %s74
      %p83 = scmp.eq.s32.totalorder %s26, 1
      %p84 = por %p82, %p83
      %p85 = scmp.ne.s32.totalorder %s74, %s75
      %p86 = scmp.eq.s32.totalorder %s26, 0
      %p87 = por %p85, %p86
      %p88 = scmp.ne.s32.totalorder %s74, %s75
      %p89 = scmp.eq.s32.totalorder %s27, 1
      %p90 = por %p88, %p89
      %p92 = scmp.ne.s32.totalorder %s75, %s91
      %p93 = scmp.eq.s32.totalorder %s27, 0
      %p94 = por %p92, %p93
      %s95 = ssub.s32 %s28, %s40
      %s96 = ssub.s32 %s29, %s36
      %s97 = sor.u32 %s95, %s96
      %p98 = scmp.eq.s32.totalorder %s97, 0
      %s100 = sadd.s32 %s99, 1
      %s101 = scalar_select %p98, %s99, %s100
      %p104 = pneg %p98
      %p105 = scmp.eq.s32.totalorder %s21, 1
      %p106 = por %p104, %p105
      %p107 = scmp.ne.s32.totalorder %s99, %s102
      %p108 = scmp.eq.s32.totalorder %s21, 0
      %p109 = por %p107, %p108
      %p110 = scmp.ne.s32.totalorder %s99, %s102
      %p111 = scmp.eq.s32.totalorder %s26, 1
      %p112 = por %p110, %p111
      %p113 = scmp.ne.s32.totalorder %s102, %s103
      %p114 = scmp.eq.s32.totalorder %s26, 0
      %p115 = por %p113, %p114
      %p116 = scmp.ne.s32.totalorder %s102, %s103
      %p117 = scmp.eq.s32.totalorder %s27, 1
      %p118 = por %p116, %p117
      %p120 = scmp.ne.s32.totalorder %s103, %s119
      %p121 = scmp.eq.s32.totalorder %s27, 0
      %p122 = por %p120, %p121
      %s124 = sadd.s32 %s123, 1
      %p127 = scmp.eq.s32.totalorder %s21, 1
      %p128 = scmp.ne.s32.totalorder %s123, %s125
      %p129 = scmp.eq.s32.totalorder %s21, 0
      %p130 = por %p128, %p129
      %p131 = scmp.ne.s32.totalorder %s123, %s125
      %p132 = scmp.eq.s32.totalorder %s26, 1
      %p133 = por %p131, %p132
      %p134 = scmp.ne.s32.totalorder %s125, %s126
      %p135 = scmp.eq.s32.totalorder %s26, 0
      %p136 = por %p134, %p135
      %p137 = scmp.ne.s32.totalorder %s125, %s126
      %p138 = scmp.eq.s32.totalorder %s27, 1
      %p139 = por %p137, %p138
      %p141 = scmp.ne.s32.totalorder %s126, %s140
      %p142 = scmp.eq.s32.totalorder %s27, 0
      %p143 = por %p141, %p142
      %s145 = sadd.s32 %s144, 1
      %p148 = scmp.eq.s32.totalorder %s21, 1
      %p149 = scmp.ne.s32.totalorder %s144, %s146
      %p150 = scmp.eq.s32.totalorder %s21, 0
      %p151 = por %p149, %p150
      %p152 = scmp.ne.s32.totalorder %s144, %s146
      %p153 = scmp.eq.s32.totalorder %s26, 1
      %p154 = por %p152, %p153
      %p155 = scmp.ne.s32.totalorder %s146, %s147
      %p156 = scmp.eq.s32.totalorder %s26, 0
      %p157 = por %p155, %p156
      %p158 = scmp.ne.s32.totalorder %s146, %s147
      %p159 = scmp.eq.s32.totalorder %s27, 1
      %p160 = por %p158, %p159
      %p162 = scmp.ne.s32.totalorder %s147, %s161
      %p163 = scmp.eq.s32.totalorder %s27, 0
      %p164 = por %p162, %p163
      %s166 = sadd.s32 %s165, 1
      %p169 = scmp.eq.s32.totalorder %s21, 1
      %p170 = scmp.ne.s32.totalorder %s165, %s167
      %p171 = scmp.eq.s32.totalorder %s21, 0
      %p172 = por %p170, %p171
      %p173 = scmp.ne.s32.totalorder %s165, %s167
      %p174 = scmp.eq.s32.totalorder %s26, 1
      %p175 = por %p173, %p174
      %p176 = scmp.ne.s32.totalorder %s167, %s168
      %p177 = scmp.eq.s32.totalorder %s26, 0
      %p178 = por %p176, %p177
      %p179 = scmp.ne.s32.totalorder %s167, %s168
      %p180 = scmp.eq.s32.totalorder %s27, 1
      %p181 = por %p179, %p180
      %p183 = scmp.ne.s32.totalorder %s168, %s182
      %p184 = scmp.eq.s32.totalorder %s27, 0
      %p185 = por %p183, %p184
      %s187 = sadd.s32 %s186, 1
      %p190 = scmp.eq.s32.totalorder %s21, 1
      %p191 = scmp.ne.s32.totalorder %s186, %s188
      %p192 = scmp.eq.s32.totalorder %s21, 0
      %p193 = por %p191, %p192
      %p194 = scmp.ne.s32.totalorder %s186, %s188
      %p195 = scmp.eq.s32.totalorder %s26, 1
      %p196 = por %p194, %p195
      %p197 = scmp.ne.s32.totalorder %s188, %s189
      %p198 = scmp.eq.s32.totalorder %s26, 0
      %p199 = por %p197, %p198
      %p200 = scmp.ne.s32.totalorder %s188, %s189
      %p201 = scmp.eq.s32.totalorder %s27, 1
      %p202 = por %p200, %p201
      %p204 = scmp.ne.s32.totalorder %s189, %s203
      %p205 = scmp.eq.s32.totalorder %s27, 0
      %p206 = por %p204, %p205
      %s208 = sadd.s32 %s207, 1
      %p211 = scmp.eq.s32.totalorder %s21, 1
      %p212 = scmp.ne.s32.totalorder %s207, %s209
      %p213 = scmp.eq.s32.totalorder %s21, 0
      %p214 = por %p212, %p213
      %p215 = scmp.ne.s32.totalorder %s207, %s209
      %p216 = scmp.eq.s32.totalorder %s26, 1
      %p217 = por %p215, %p216
      %p218 = scmp.ne.s32.totalorder %s209, %s210
      %p219 = scmp.eq.s32.totalorder %s26, 0
      %p220 = por %p218, %p219
      %p221 = scmp.ne.s32.totalorder %s209, %s210
      %p222 = scmp.eq.s32.totalorder %s27, 1
      %p223 = por %p221, %p222
      %p225 = scmp.ne.s32.totalorder %s210, %s224
      %p226 = scmp.eq.s32.totalorder %s27, 0
      %p227 = por %p225, %p226
      %s228 = ssub.s32 %s28, %s40
      %p229 = scmp.eq.s32.totalorder %s228, 0
      %s231 = sadd.s32 %s230, 1
      %s232 = scalar_select %p229, %s230, %s231
      %p235 = pneg %p229
      %p236 = scmp.eq.s32.totalorder %s21, 1
      %p237 = por %p235, %p236
      %p238 = scmp.ne.s32.totalorder %s230, %s233
      %p239 = scmp.eq.s32.totalorder %s21, 0
      %p240 = por %p238, %p239
      %p241 = scmp.ne.s32.totalorder %s230, %s233
      %p242 = scmp.eq.s32.totalorder %s26, 1
      %p243 = por %p241, %p242
      %p244 = scmp.ne.s32.totalorder %s233, %s234
      %p245 = scmp.eq.s32.totalorder %s26, 0
      %p246 = por %p244, %p245
      %p247 = scmp.ne.s32.totalorder %s233, %s234
      %p248 = scmp.eq.s32.totalorder %s27, 1
      %p249 = por %p247, %p248
      %p251 = scmp.ne.s32.totalorder %s234, %s250
      %p252 = scmp.eq.s32.totalorder %s27, 0
      %p253 = por %p251, %p252
      %p254 = scmp.le.s32.totalorder 1, %s21
      %p255 = scmp.lt.s32.totalorder %s21, 3
      %p256 = pnand %p254, %p255
      %p257 = pneg %p256
      // Predicated region
      $region9: #{tpu_custom_call.1} parent=5 // pred_check
        _
      $region10: #{tpu_custom_call.1} parent=5 // pred_check_branch
        %259 = sbr.rel (%p256) target = $region12
      $region11: #{tpu_custom_call.1} parent=5 // pred_region
        %s260 = ssub.s32 %s21, 1
        // Predicated region
        $region13: #{tpu_custom_call.1} parent=11 // pred_check
          %p261 = pneg %p136
        $region14: #{tpu_custom_call.1} parent=11 // pred_check_branch
          %263 = sbr.rel (%p261) target = $region16
        $region15: #{tpu_custom_call.1} parent=11 // pred_region
          _
        $region16: #{tpu_custom_call.1} parent=11 // pred_fallthru
          _
        // Predicated region
        $region17: #{tpu_custom_call.1} parent=11 // pred_check
          %p264 = pneg %p157
        $region18: #{tpu_custom_call.1} parent=11 // pred_check_branch
          %266 = sbr.rel (%p264) target = $region20
        $region19: #{tpu_custom_call.1} parent=11 // pred_region
          _
        $region20: #{tpu_custom_call.1} parent=11 // pred_fallthru
          _
        // Predicated region
        $region21: #{tpu_custom_call.1} parent=11 // pred_check
          %p267 = pneg %p178
        $region22: #{tpu_custom_call.1} parent=11 // pred_check_branch
          %269 = sbr.rel (%p267) target = $region24
        $region23: #{tpu_custom_call.1} parent=11 // pred_region
          _
        $region24: #{tpu_custom_call.1} parent=11 // pred_fallthru
          _
        // Predicated region
        $region25: #{tpu_custom_call.1} parent=11 // pred_check
          %p270 = pneg %p199
        $region26: #{tpu_custom_call.1} parent=11 // pred_check_branch
          %272 = sbr.rel (%p270) target = $region28
        $region27: #{tpu_custom_call.1} parent=11 // pred_region
          _
        $region28: #{tpu_custom_call.1} parent=11 // pred_fallthru
          _
        // Predicated region
        $region29: #{tpu_custom_call.1} parent=11 // pred_check
          %p273 = pneg %p220
        $region30: #{tpu_custom_call.1} parent=11 // pred_check_branch
          %275 = sbr.rel (%p273) target = $region32
        $region31: #{tpu_custom_call.1} parent=11 // pred_region
          _
        $region32: #{tpu_custom_call.1} parent=11 // pred_fallthru
          _
      $region12: #{tpu_custom_call.1} parent=5 // pred_fallthru
        _
      %p276 = scmp.lt.s32.totalorder %s21, 2
      // Predicated region
      $region33: #{tpu_custom_call.1} parent=5 // pred_check
        %p277 = pneg %p276
      $region34: #{tpu_custom_call.1} parent=5 // pred_check_branch
        %279 = sbr.rel (%p277) target = $region36
      $region35: #{tpu_custom_call.1} parent=5 // pred_region
        // Predicated region
        $region37: #{tpu_custom_call.1} parent=35 // pred_check
          %p280 = pneg %p53
        $region38: #{tpu_custom_call.1} parent=35 // pred_check_branch
          %282 = sbr.rel (%p280) target = $region40
        $region39: #{tpu_custom_call.1} parent=35 // pred_region
          %p283 = scmp.lt.s32.totalorder %s28, 1
          %s284 = scalar_select %p283, %s28, 1
          %s285 = smul.addr %s284, 8
          %s286 = scalar_lea.vmem %s0, %s285
        $region40: #{tpu_custom_call.1} parent=35 // pred_fallthru
          _
        // Predicated region
        $region41: #{tpu_custom_call.1} parent=35 // pred_check
          %p287 = pneg %p81
        $region42: #{tpu_custom_call.1} parent=35 // pred_check_branch
          %289 = sbr.rel (%p287) target = $region44
        $region43: #{tpu_custom_call.1} parent=35 // pred_region
          %s290 = sand.u32 %s71, 1
          %s291 = scalar_lea.sflag [#allocation6], %s290
          %s292 = sand.u32 %s71, 1
          %s293 = smul.addr %s292, 64
          %s294 = scalar_lea.vmem [#allocation5], %s293
          %s295 = smul.u32 8, %s28
          %s297 = ssub.s32 1024, 1024
          %298 = vsyncadd %s291, %s297
          %s299 = sadd.s32 %s29, %s295
          %s300 = smul.addr %s299, 128
          %s301 = scalar_lea.hbm %s1, %s300
          %s302 = sshll.u32 %s294, 4
          %s303 = int_to_ptr.vmem [resolvable:$true] %s302
          %308 = dma.hbm_to_vmem [thread:$0]  %s301, 1024, %s303, %s291, 128, 128, 8
        $region44: #{tpu_custom_call.1} parent=35 // pred_fallthru
          _
        // Predicated region
        $region45: #{tpu_custom_call.1} parent=35 // pred_check
          %p309 = pneg %p109
        $region46: #{tpu_custom_call.1} parent=35 // pred_check_branch
          %311 = sbr.rel (%p309) target = $region48
        $region47: #{tpu_custom_call.1} parent=35 // pred_region
          %p312 = scmp.lt.s32.totalorder %s28, 1
          %s313 = scalar_select %p312, %s28, 1
          %p314 = scmp.lt.s32.totalorder %s29, 0
          %s315 = scalar_select %p314, %s29, 0
          %s316 = sadd.s32 %s315, %s313
          %s317 = smul.addr %s316, 8
          %s318 = scalar_lea.vmem %s2, %s317
        $region48: #{tpu_custom_call.1} parent=35 // pred_fallthru
          _
      $region36: #{tpu_custom_call.1} parent=5 // pred_fallthru
        _
      %p319 = scmp.le.s32.totalorder 1, %s21
      %p320 = scmp.lt.s32.totalorder %s21, 3
      %p321 = pnand %p319, %p320
      %p322 = pneg %p321
      // Predicated region
      $region49: #{tpu_custom_call.1} parent=5 // pred_check
        _
      $region50: #{tpu_custom_call.1} parent=5 // pred_check_branch
        %324 = sbr.rel (%p321) target = $region52
      $region51: #{tpu_custom_call.1} parent=5 // pred_region
        %s325 = ssub.s32 %s21, 1
        %s326 = sand.u32 %s74, 1
        %s327 = scalar_lea.sflag [#allocation6], %s326
        %s328 = sand.u32 %s74, 1
        %s329 = smul.addr %s328, 64
        %s330 = scalar_lea.vmem [#allocation5], %s329
        // Predicated region
        $region53: #{tpu_custom_call.1} parent=51 // pred_check
          %p331 = pneg %p87
        $region54: #{tpu_custom_call.1} parent=51 // pred_check_branch
          %333 = sbr.rel (%p331) target = $region56
        $region55: #{tpu_custom_call.1} parent=51 // pred_region
          %334 = dma.done %s327, 1024
        $region56: #{tpu_custom_call.1} parent=51 // pred_fallthru
          _
        %p335 = scmp.lt.s32.totalorder %s30, 1
        %s336 = scalar_select %p335, %s30, 1
        %s337 = smul.addr %s336, 8
        %s338 = scalar_lea.vmem %s0, %s337
        %p339 = pneg %p59
        %p340 = pneg %p56
        %s341 = sand.u32 %s74, 1
        %s342 = scalar_lea.sflag [#allocation6], %s341
        %s343 = sand.u32 %s74, 1
        %s344 = smul.addr %s343, 64
        %s345 = scalar_lea.vmem [#allocation5], %s344
        %p346 = pneg %p87
        %p347 = pneg %p84
        %p348 = scmp.lt.s32.totalorder %s30, 1
        %s349 = scalar_select %p348, %s30, 1
        %p350 = scmp.lt.s32.totalorder %s31, 0
        %s351 = scalar_select %p350, %s31, 0
        %s352 = sadd.s32 %s351, %s349
        %s353 = smul.addr %s352, 8
        %s354 = scalar_lea.vmem %s2, %s353
        %p355 = pneg %p115
        %p356 = pneg %p112
        %p357 = pneg %p136
        %p358 = pneg %p133
        %p359 = pneg %p157
        %p360 = pneg %p154
        %p361 = pneg %p178
        %p362 = pneg %p175
        %p363 = pneg %p199
        %p364 = pneg %p196
        %p365 = pneg %p220
        %p366 = pneg %p217
        %p367 = pneg %p246
        %p368 = pneg %p243
        %s369 = sand.u32 %s233, 1
        %s370 = scalar_lea.sflag [#allocation7], %s369
        %s371 = sand.u32 %s233, 1
        %s372 = smul.addr %s371, 8
        %s373 = scalar_lea.vmem [#allocation8], %s372
        %p374 = scmp.lt.s32.totalorder %s30, 1
        %s375 = scalar_select %p374, %s30, 1
        %s376 = smul.addr %s375, 8
        %s377 = scalar_lea.vmem %s0, %s376
        %s378 = smul.u32 8, %s30
        %p379 = scmp.lt.s32.totalorder %s30, 1
        %s380 = scalar_select %p379, %s30, 1
        %p381 = scmp.lt.s32.totalorder %s31, 0
        %s382 = scalar_select %p381, %s31, 0
        %s383 = sadd.s32 %s382, %s380
        %s384 = smul.addr %s383, 8
        %s385 = scalar_lea.vmem %s2, %s384
        %p386 = scmp.eq.s32.totalorder %s31, 0
        // Predicated region
        $region57: #{tpu_custom_call.1} parent=51 // pred_check
          %p387 = pneg %p386
        $region58: #{tpu_custom_call.1} parent=51 // pred_check_branch
          %389 = sbr.rel (%p387) target = $region60
        $region59: #{tpu_custom_call.1} parent=51 // pred_region
          %v390 = vld [vmem:[%s377] sm:$0xff]
          %v391 = vld [vmem:[%s3] sm:$0xff]
          %v392 = vld [vmem:[%s3 + $0x8] sm:$0xff]
          %v393 = vld [vmem:[%s3 + $0x10] sm:$0xff]
          %v394 = vld [vmem:[%s3 + $0x18] sm:$0xff]
          %vm395 = vcmask 261120
          %v397 = vsel %vm395, %v390, 0
          %399 = vmatprep.subr.mxu0 0.0
          %400 = vmatpush1.msra.mxu0 %v391
          %401 = vmatprep.subr.mxu0 0.0
          %402 = vmatpush1.msra.mxu0 %v392
          %403 = vmatprep.subr.mxu0 0.0
          %404 = vmatpush1.msra.mxu0 %v393
          %405 = vmatprep.subr.mxu0 0.0
          %406 = vmatpush1.msra.mxu0 %v394
          %407 = vmatprep.subr.mxu0 0.0
          %408 = vmatpush1.msra.mxu0 0.0
          %409 = vmatprep.subr.mxu0 0.0
          %410 = vmatpush1.msra.mxu0 0.0
          %411 = vmatprep.subr.mxu0 0.0
          %412 = vmatpush1.msra.mxu0 0.0
          %413 = vmatprep.subr.mxu0 0.0
          %414 = vmatpush1.msra.mxu0 0.0
          %415 = vmatprep.subr.mxu0 0.0
          %416 = vmatpush1.msra.mxu0 0.0
          %417 = vmatprep.subr.mxu0 0.0
          %418 = vmatpush1.msra.mxu0 0.0
          %419 = vmatprep.subr.mxu0 0.0
          %420 = vmatpush1.msra.mxu0 0.0
          %421 = vmatprep.subr.mxu0 0.0
          %422 = vmatpush1.msra.mxu0 0.0
          %423 = vmatprep.subr.mxu0 0.0
          %424 = vmatpush1.msra.mxu0 0.0
          %425 = vmatprep.subr.mxu0 0.0
          %426 = vmatpush1.msra.mxu0 0.0
          %427 = vmatprep.subr.mxu0 0.0
          %428 = vmatpush1.msra.mxu0 0.0
          %429 = vmatprep.subr.mxu0 0.0
          %430 = vmatpush1.msra.mxu0 0.0
          %431 = vmatprep.subr.mxu0 0.0
          %432 = vmatpush1.msra.mxu0 0.0
          %433 = vmatprep.subr.mxu0 0.0
          %434 = vmatpush1.msra.mxu0 0.0
          %435 = vmatprep.subr.mxu0 0.0
          %436 = vmatpush1.msra.mxu0 0.0
          %437 = vmatprep.subr.mxu0 0.0
          %438 = vmatpush1.msra.mxu0 0.0
          %439 = vmatprep.subr.mxu0 0.0
          %440 = vmatpush1.msra.mxu0 0.0
          %441 = vmatprep.subr.mxu0 0.0
          %442 = vmatpush1.msra.mxu0 0.0
          %443 = vmatprep.subr.mxu0 0.0
          %444 = vmatpush1.msra.mxu0 0.0
          %445 = vmatprep.subr.mxu0 0.0
          %446 = vmatpush1.msra.mxu0 0.0
          %447 = vmatprep.subr.mxu0 0.0
          %448 = vmatpush1.msra.mxu0 0.0
          %449 = vmatprep.subr.mxu0 0.0
          %450 = vmatpush1.msra.mxu0 0.0
          %451 = vmatprep.subr.mxu0 0.0
          %452 = vmatpush1.msra.mxu0 0.0
          %453 = vmatprep.subr.mxu0 0.0
          %454 = vmatpush1.msra.mxu0 0.0
          %455 = vmatprep.subr.mxu0 0.0
          %456 = vmatpush1.msra.mxu0 0.0
          %457 = vmatprep.subr.mxu0 0.0
          %458 = vmatpush1.msra.mxu0 0.0
          %459 = vmatprep.subr.mxu0 0.0
          %460 = vmatpush1.msra.mxu0 0.0
          %461 = vmatprep.subr.mxu0 0.0
          %462 = vmatpush1.msra.mxu0 0.0
          %463 = vmatprep.mubr.f32.mxu0 0.0
          %464 = vmatmul.mubr.f32.gmra.mrb[0].mxu0 %v397
          %v465 = vpop.f32.mrb[0].mxu0
          %v466 = vadd.f32 0.0, %v465
          %v467 = vpop.f32.mrb[0].mxu0
          %468 = vdwg.mxu0
          %469 = vst.msk [vmem:[#allocation2] sm:$0xff] %vm395, %v466
          %470 = vst.msk [vmem:[#allocation3] sm:$0xff] %vm395, 0.0
        $region60: #{tpu_custom_call.1} parent=51 // pred_fallthru
          _
        %v471 = vld [vmem:[%s330] sm:$0xff]
        %v472 = vld [vmem:[%s330 + $0x8] sm:$0xff]
        %v473 = vld [vmem:[%s330 + $0x10] sm:$0xff]
        %v474 = vld [vmem:[%s330 + $0x18] sm:$0xff]
        %v475 = vld [vmem:[%s330 + $0x20] sm:$0xff]
        %v476 = vld [vmem:[%s330 + $0x28] sm:$0xff]
        %v477 = vld [vmem:[%s330 + $0x30] sm:$0xff]
        %v478 = vld [vmem:[%s330 + $0x38] sm:$0xff]
        %v479 = vld [vmem:[%s377] sm:$0xff]
        %v481 = vcombine.high %v479, %v479
        %v483 = vunpack.c.l.s4 1966171168
        %v484 = vunpack.c.0.s8 %v483
        %v485 = vlaneseq
        %v486 = vshrl.u32 %v485, 7
        %v487 = vsub.s32 %v484, %v486
        %v488 = vrot.slane %v479, %v487
        %v490 = vunpack.c.l.s4 1966171168
        %v491 = vunpack.c.0.s8 %v490
        %v492 = vlaneseq
        %v493 = vshrl.u32 %v492, 7
        %v494 = vsub.s32 %v491, %v493
        %v495 = vrot.slane %v481, %v494
        %v496 = vcombine.high %v488, %v488
        %v497 = vcombine.high %v495, %v495
        %v499 = vunpack.c.l.s4 1966171168
        %v500 = vunpack.c.0.s8 %v499
        %v501 = vlaneseq
        %v502 = vshrl.u32 %v501, 7
        %v503 = vsub.s32 %v500, %v502
        %v504 = vrot.slane %v488, %v503
        %v506 = vunpack.c.l.s4 1966171168
        %v507 = vunpack.c.0.s8 %v506
        %v508 = vlaneseq
        %v509 = vshrl.u32 %v508, 7
        %v510 = vsub.s32 %v507, %v509
        %v511 = vrot.slane %v495, %v510
        %v513 = vunpack.c.l.s4 1966171168
        %v514 = vunpack.c.0.s8 %v513
        %v515 = vlaneseq
        %v516 = vshrl.u32 %v515, 7
        %v517 = vsub.s32 %v514, %v516
        %v518 = vrot.slane %v496, %v517
        %v520 = vunpack.c.l.s4 1966171168
        %v521 = vunpack.c.0.s8 %v520
        %v522 = vlaneseq
        %v523 = vshrl.u32 %v522, 7
        %v524 = vsub.s32 %v521, %v523
        %v525 = vrot.slane %v497, %v524
        %v526 = vcombine.high %v504, %v504
        %v527 = vcombine.high %v511, %v511
        %v528 = vcombine.high %v518, %v518
        %v529 = vcombine.high %v525, %v525
        %v530 = vlaneseq
        %v531 = vshrl.u32 %v530, 7
        %v532 = vsub.s32 0, %v531
        %v533 = vrot.slane %v504, %v532
        %v534 = vlaneseq
        %v535 = vshrl.u32 %v534, 7
        %v536 = vsub.s32 0, %v535
        %v537 = vrot.slane %v518, %v536
        %v538 = vlaneseq
        %v539 = vshrl.u32 %v538, 7
        %v540 = vsub.s32 0, %v539
        %v541 = vrot.slane %v526, %v540
        %v542 = vlaneseq
        %v543 = vshrl.u32 %v542, 7
        %v544 = vsub.s32 0, %v543
        %v545 = vrot.slane %v528, %v544
        %v546 = vlaneseq
        %v547 = vshrl.u32 %v546, 7
        %v548 = vsub.s32 0, %v547
        %v549 = vrot.slane %v511, %v548
        %v550 = vlaneseq
        %v551 = vshrl.u32 %v550, 7
        %v552 = vsub.s32 0, %v551
        %v553 = vrot.slane %v525, %v552
        %v554 = vlaneseq
        %v555 = vshrl.u32 %v554, 7
        %v556 = vsub.s32 0, %v555
        %v557 = vrot.slane %v527, %v556
        %v558 = vlaneseq
        %v559 = vshrl.u32 %v558, 7
        %v560 = vsub.s32 0, %v559
        %v561 = vrot.slane %v529, %v560
        %v570 = vmul.f32 %v533, %v471
        %v571 = vmul.f32 %v537, %v472
        %v572 = vmul.f32 %v541, %v473
        %v573 = vmul.f32 %v545, %v474
        %v574 = vmul.f32 %v549, %v475
        %v575 = vmul.f32 %v553, %v476
        %v576 = vmul.f32 %v557, %v477
        %v577 = vmul.f32 %v561, %v478
        %586 = vrot.lane.b32.xlu0 %v570, 32
        %v587 = vpop.permute.xlu0 %586
        %588 = vrot.lane.b32.xlu0 %v571, 32
        %v589 = vpop.permute.xlu0 %588
        %590 = vrot.lane.b32.xlu0 %v572, 32
        %v591 = vpop.permute.xlu0 %590
        %592 = vrot.lane.b32.xlu0 %v573, 32
        %v593 = vpop.permute.xlu0 %592
        %594 = vrot.lane.b32.xlu0 %v574, 32
        %v595 = vpop.permute.xlu0 %594
        %596 = vrot.lane.b32.xlu0 %v575, 32
        %v597 = vpop.permute.xlu0 %596
        %598 = vrot.lane.b32.xlu0 %v576, 32
        %v599 = vpop.permute.xlu0 %598
        %600 = vrot.lane.b32.xlu0 %v577, 32
        %v601 = vpop.permute.xlu0 %600
        %vm610 = vcmask 261120
        %v611 = vsel %vm610, %v471, %v587
        %v612 = vsel %vm610, %v472, %v589
        %v613 = vsel %vm610, %v473, %v591
        %v614 = vsel %vm610, %v474, %v593
        %v615 = vsel %vm610, %v475, %v595
        %v616 = vsel %vm610, %v476, %v597
        %v617 = vsel %vm610, %v477, %v599
        %v618 = vsel %vm610, %v478, %v601
        %v619 = vld [vmem:[%s4] sm:$0xff]
        %v620 = vld [vmem:[%s4 + $0x8] sm:$0xff]
        %v621 = vld [vmem:[%s4 + $0x10] sm:$0xff]
        %v622 = vld [vmem:[%s4 + $0x18] sm:$0xff]
        %v623 = vld [vmem:[%s4 + $0x20] sm:$0xff]
        %v624 = vld [vmem:[%s4 + $0x28] sm:$0xff]
        %v625 = vld [vmem:[%s4 + $0x30] sm:$0xff]
        %v626 = vld [vmem:[%s4 + $0x38] sm:$0xff]
        %vm627 = vcmask 523264
        %v629 = vsel %vm627, %v611, 0
        %v632 = vsel %vm627, %v612, 0
        %v635 = vsel %vm627, %v613, 0
        %v638 = vsel %vm627, %v614, 0
        %v641 = vsel %vm627, %v615, 0
        %v644 = vsel %vm627, %v616, 0
        %v647 = vsel %vm627, %v617, 0
        %v650 = vsel %vm627, %v618, 0
        %652 = vmatprep.subr.mxu0 0.0
        %653 = vmatpush1.msra.mxu0 %v619
        %654 = vmatprep.subr.mxu0 0.0
        %655 = vmatpush1.msra.mxu0 %v620
        %656 = vmatprep.subr.mxu0 0.0
        %657 = vmatpush1.msra.mxu0 %v621
        %658 = vmatprep.subr.mxu0 0.0
        %659 = vmatpush1.msra.mxu0 %v622
        %660 = vmatprep.subr.mxu0 0.0
        %661 = vmatpush1.msra.mxu0 %v623
        %662 = vmatprep.subr.mxu0 0.0
        %663 = vmatpush1.msra.mxu0 %v624
        %664 = vmatprep.subr.mxu0 0.0
        %665 = vmatpush1.msra.mxu0 %v625
        %666 = vmatprep.subr.mxu0 0.0
        %667 = vmatpush1.msra.mxu0 %v626
        %668 = vmatprep.subr.mxu0 0.0
        %669 = vmatpush1.msra.mxu0 0.0
        %670 = vmatprep.subr.mxu0 0.0
        %671 = vmatpush1.msra.mxu0 0.0
        %672 = vmatprep.subr.mxu0 0.0
        %673 = vmatpush1.msra.mxu0 0.0
        %674 = vmatprep.subr.mxu0 0.0
        %675 = vmatpush1.msra.mxu0 0.0
        %676 = vmatprep.subr.mxu0 0.0
        %677 = vmatpush1.msra.mxu0 0.0
        %678 = vmatprep.subr.mxu0 0.0
        %679 = vmatpush1.msra.mxu0 0.0
        %680 = vmatprep.subr.mxu0 0.0
        %681 = vmatpush1.msra.mxu0 0.0
        %682 = vmatprep.subr.mxu0 0.0
        %683 = vmatpush1.msra.mxu0 0.0
        %684 = vmatprep.subr.mxu0 0.0
        %685 = vmatpush1.msra.mxu0 0.0
        %686 = vmatprep.subr.mxu0 0.0
        %687 = vmatpush1.msra.mxu0 0.0
        %688 = vmatprep.subr.mxu0 0.0
        %689 = vmatpush1.msra.mxu0 0.0
        %690 = vmatprep.subr.mxu0 0.0
        %691 = vmatpush1.msra.mxu0 0.0
        %692 = vmatprep.subr.mxu0 0.0
        %693 = vmatpush1.msra.mxu0 0.0
        %694 = vmatprep.subr.mxu0 0.0
        %695 = vmatpush1.msra.mxu0 0.0
        %696 = vmatprep.subr.mxu0 0.0
        %697 = vmatpush1.msra.mxu0 0.0
        %698 = vmatprep.subr.mxu0 0.0
        %699 = vmatpush1.msra.mxu0 0.0
        %700 = vmatprep.subr.mxu0 0.0
        %701 = vmatpush1.msra.mxu0 0.0
        %702 = vmatprep.subr.mxu0 0.0
        %703 = vmatpush1.msra.mxu0 0.0
        %704 = vmatprep.subr.mxu0 0.0
        %705 = vmatpush1.msra.mxu0 0.0
        %706 = vmatprep.subr.mxu0 0.0
        %707 = vmatpush1.msra.mxu0 0.0
        %708 = vmatprep.subr.mxu0 0.0
        %709 = vmatpush1.msra.mxu0 0.0
        %710 = vmatprep.subr.mxu0 0.0
        %711 = vmatpush1.msra.mxu0 0.0
        %712 = vmatprep.subr.mxu0 0.0
        %713 = vmatpush1.msra.mxu0 0.0
        %714 = vmatprep.subr.mxu0 0.0
        %715 = vmatpush1.msra.mxu0 0.0
        %716 = vmatprep.mubr.f32.mxu0 0.0
        %717 = vmatmul.mubr.f32.gmra.mrb[0].mxu0 %v629
        %v718 = vpop.f32.mrb[0].mxu0
        %v719 = vadd.f32 0.0, %v718
        %v720 = vpop.f32.mrb[0].mxu0
        %721 = vmatprep.mubr.f32.mxu0 0.0
        %722 = vmatmul.mubr.f32.gmra.mrb[0].mxu0 %v632
        %v723 = vpop.f32.mrb[0].mxu0
        %v724 = vadd.f32 0.0, %v723
        %v725 = vpop.f32.mrb[0].mxu0
        %726 = vmatprep.mubr.f32.mxu0 0.0
        %727 = vmatmul.mubr.f32.gmra.mrb[0].mxu0 %v635
        %v728 = vpop.f32.mrb[0].mxu0
        %v729 = vadd.f32 0.0, %v728
        %v730 = vpop.f32.mrb[0].mxu0
        %731 = vmatprep.mubr.f32.mxu0 0.0
        %732 = vmatmul.mubr.f32.gmra.mrb[0].mxu0 %v638
        %v733 = vpop.f32.mrb[0].mxu0
        %v734 = vadd.f32 0.0, %v733
        %v735 = vpop.f32.mrb[0].mxu0
        %736 = vmatprep.mubr.f32.mxu0 0.0
        %737 = vmatmul.mubr.f32.gmra.mrb[0].mxu0 %v641
        %v738 = vpop.f32.mrb[0].mxu0
        %v739 = vadd.f32 0.0, %v738
        %v740 = vpop.f32.mrb[0].mxu0
        %741 = vmatprep.mubr.f32.mxu0 0.0
        %742 = vmatmul.mubr.f32.gmra.mrb[0].mxu0 %v644
        %v743 = vpop.f32.mrb[0].mxu0
        %v744 = vadd.f32 0.0, %v743
        %v745 = vpop.f32.mrb[0].mxu0
        %746 = vmatprep.mubr.f32.mxu0 0.0
        %747 = vmatmul.mubr.f32.gmra.mrb[0].mxu0 %v647
        %v748 = vpop.f32.mrb[0].mxu0
        %v749 = vadd.f32 0.0, %v748
        %v750 = vpop.f32.mrb[0].mxu0
        %751 = vmatprep.mubr.f32.mxu0 0.0
        %752 = vmatmul.mubr.f32.gmra.mrb[0].mxu0 %v650
        %v753 = vpop.f32.mrb[0].mxu0
        %v754 = vadd.f32 0.0, %v753
        %v755 = vpop.f32.mrb[0].mxu0
        %756 = vdwg.mxu0
        %v757 = vld [vmem:[#allocation2] sm:$0xff]
        %v759 = vcombine.high %v757, %v757
        %v761 = vunpack.c.l.s4 1966171168
        %v762 = vunpack.c.0.s8 %v761
        %v763 = vlaneseq
        %v764 = vshrl.u32 %v763, 7
        %v765 = vsub.s32 %v762, %v764
        %v766 = vrot.slane %v757, %v765
        %v768 = vunpack.c.l.s4 1966171168
        %v769 = vunpack.c.0.s8 %v768
        %v770 = vlaneseq
        %v771 = vshrl.u32 %v770, 7
        %v772 = vsub.s32 %v769, %v771
        %v773 = vrot.slane %v759, %v772
        %v774 = vcombine.high %v766, %v766
        %v775 = vcombine.high %v773, %v773
        %v777 = vunpack.c.l.s4 1966171168
        %v778 = vunpack.c.0.s8 %v777
        %v779 = vlaneseq
        %v780 = vshrl.u32 %v779, 7
        %v781 = vsub.s32 %v778, %v780
        %v782 = vrot.slane %v766, %v781
        %v784 = vunpack.c.l.s4 1966171168
        %v785 = vunpack.c.0.s8 %v784
        %v786 = vlaneseq
        %v787 = vshrl.u32 %v786, 7
        %v788 = vsub.s32 %v785, %v787
        %v789 = vrot.slane %v773, %v788
        %v791 = vunpack.c.l.s4 1966171168
        %v792 = vunpack.c.0.s8 %v791
        %v793 = vlaneseq
        %v794 = vshrl.u32 %v793, 7
        %v795 = vsub.s32 %v792, %v794
        %v796 = vrot.slane %v774, %v795
        %v798 = vunpack.c.l.s4 1966171168
        %v799 = vunpack.c.0.s8 %v798
        %v800 = vlaneseq
        %v801 = vshrl.u32 %v800, 7
        %v802 = vsub.s32 %v799, %v801
        %v803 = vrot.slane %v775, %v802
        %v804 = vcombine.high %v782, %v782
        %v805 = vcombine.high %v789, %v789
        %v806 = vcombine.high %v796, %v796
        %v807 = vcombine.high %v803, %v803
        %v808 = vlaneseq
        %v809 = vshrl.u32 %v808, 7
        %v810 = vsub.s32 0, %v809
        %v811 = vrot.slane %v782, %v810
        %v812 = vlaneseq
        %v813 = vshrl.u32 %v812, 7
        %v814 = vsub.s32 0, %v813
        %v815 = vrot.slane %v796, %v814
        %v816 = vlaneseq
        %v817 = vshrl.u32 %v816, 7
        %v818 = vsub.s32 0, %v817
        %v819 = vrot.slane %v804, %v818
        %v820 = vlaneseq
        %v821 = vshrl.u32 %v820, 7
        %v822 = vsub.s32 0, %v821
        %v823 = vrot.slane %v806, %v822
        %v824 = vlaneseq
        %v825 = vshrl.u32 %v824, 7
        %v826 = vsub.s32 0, %v825
        %v827 = vrot.slane %v789, %v826
        %v828 = vlaneseq
        %v829 = vshrl.u32 %v828, 7
        %v830 = vsub.s32 0, %v829
        %v831 = vrot.slane %v803, %v830
        %v832 = vlaneseq
        %v833 = vshrl.u32 %v832, 7
        %v834 = vsub.s32 0, %v833
        %v835 = vrot.slane %v805, %v834
        %v836 = vlaneseq
        %v837 = vshrl.u32 %v836, 7
        %v838 = vsub.s32 0, %v837
        %v839 = vrot.slane %v807, %v838
        %v848 = vadd.f32 %v719, %v811
        %v849 = vadd.f32 %v724, %v815
        %v850 = vadd.f32 %v729, %v819
        %v851 = vadd.f32 %v734, %v823
        %v852 = vadd.f32 %v739, %v827
        %v853 = vadd.f32 %v744, %v831
        %v854 = vadd.f32 %v749, %v835
        %v855 = vadd.f32 %v754, %v839
        %v856 = vld [vmem:[%s5] sm:$0x1]
        %v858 = vlaneseq
        %v859 = vshrl.u32 %v858, 7
        %v860 = vsub.s32 0, %v859
        %v861 = vrot.slane %v856, %v860
        %v863 = vadd.f32 %v848, %v861
        %v864 = vadd.f32 %v849, %v861
        %v865 = vadd.f32 %v850, %v861
        %v866 = vadd.f32 %v851, %v861
        %v867 = vadd.f32 %v852, %v861
        %v868 = vadd.f32 %v853, %v861
        %v869 = vadd.f32 %v854, %v861
        %v870 = vadd.f32 %v855, %v861
        %v871 = vmax.f32 %v863, 0.0
        %v872 = vmax.f32 %v864, 0.0
        %v873 = vmax.f32 %v865, 0.0
        %v874 = vmax.f32 %v866, 0.0
        %v875 = vmax.f32 %v867, 0.0
        %v876 = vmax.f32 %v868, 0.0
        %v877 = vmax.f32 %v869, 0.0
        %v878 = vmax.f32 %v870, 0.0
        %v879 = vld [vmem:[%s6] sm:$0x1]
        %v881 = vlaneseq
        %v882 = vshrl.u32 %v881, 7
        %v883 = vsub.s32 0, %v882
        %v884 = vrot.slane %v879, %v883
        %v886 = vmul.f32 %v871, %v884
        %v887 = vmul.f32 %v872, %v884
        %v888 = vmul.f32 %v873, %v884
        %v889 = vmul.f32 %v874, %v884
        %v890 = vmul.f32 %v875, %v884
        %v891 = vmul.f32 %v876, %v884
        %v892 = vmul.f32 %v877, %v884
        %v893 = vmul.f32 %v878, %v884
        %v894 = vsel %vm610, %v886, 0.0
        %895 = vadd.xlane.f32.xlu0 %v894
        %v896 = vpop.xlane.xlu0 %895
        %v897 = vsel %vm610, %v887, 0.0
        %898 = vadd.xlane.f32.xlu0 %v897
        %v899 = vpop.xlane.xlu0 %898
        %v900 = vsel %vm610, %v888, 0.0
        %901 = vadd.xlane.f32.xlu0 %v900
        %v902 = vpop.xlane.xlu0 %901
        %v903 = vsel %vm610, %v889, 0.0
        %904 = vadd.xlane.f32.xlu0 %v903
        %v905 = vpop.xlane.xlu0 %904
        %v906 = vsel %vm610, %v890, 0.0
        %907 = vadd.xlane.f32.xlu0 %v906
        %v908 = vpop.xlane.xlu0 %907
        %v909 = vsel %vm610, %v891, 0.0
        %910 = vadd.xlane.f32.xlu0 %v909
        %v911 = vpop.xlane.xlu0 %910
        %v912 = vsel %vm610, %v892, 0.0
        %913 = vadd.xlane.f32.xlu0 %v912
        %v914 = vpop.xlane.xlu0 %913
        %v915 = vsel %vm610, %v893, 0.0
        %916 = vadd.xlane.f32.xlu0 %v915
        %v917 = vpop.xlane.xlu0 %916
        %s918 = sld [smem:[#allocation4]]
        %v919 = vstv %s918
        %v920 = vadd.f32 %v896, %v919
        %v921 = vadd.f32 %v899, %v919
        %v922 = vadd.f32 %v902, %v919
        %v923 = vadd.f32 %v905, %v919
        %v924 = vadd.f32 %v908, %v919
        %v925 = vadd.f32 %v911, %v919
        %v926 = vadd.f32 %v914, %v919
        %v927 = vadd.f32 %v917, %v919
        %v928 = vld [vmem:[%s385] sm:$0xff]
        %v930 = vlaneseq
        %v931 = vshrl.u32 %v930, 7
        %v932 = vsub.s32 0, %v931
        %v933 = vrot.slane %v928, %v932
        %935 = vbcast.lane.b32.xlu0 %v933, 256
        %v936 = vpop.permute.xlu0 %935
        %v937 = vlaneseq
        %v938 = vshrl.u32 %v937, 7
        %v939 = vsub.s32 1, %v938
        %v940 = vrot.slane %v928, %v939
        %942 = vbcast.lane.b32.xlu0 %v940, 256
        %v943 = vpop.permute.xlu0 %942
        %v944 = vlaneseq
        %v945 = vshrl.u32 %v944, 7
        %v946 = vsub.s32 2, %v945
        %v947 = vrot.slane %v928, %v946
        %949 = vbcast.lane.b32.xlu0 %v947, 256
        %v950 = vpop.permute.xlu0 %949
        %v951 = vlaneseq
        %v952 = vshrl.u32 %v951, 7
        %v953 = vsub.s32 3, %v952
        %v954 = vrot.slane %v928, %v953
        %956 = vbcast.lane.b32.xlu0 %v954, 256
        %v957 = vpop.permute.xlu0 %956
        %v958 = vlaneseq
        %v959 = vshrl.u32 %v958, 7
        %v960 = vsub.s32 4, %v959
        %v961 = vrot.slane %v928, %v960
        %963 = vbcast.lane.b32.xlu0 %v961, 256
        %v964 = vpop.permute.xlu0 %963
        %v965 = vlaneseq
        %v966 = vshrl.u32 %v965, 7
        %v967 = vsub.s32 5, %v966
        %v968 = vrot.slane %v928, %v967
        %970 = vbcast.lane.b32.xlu0 %v968, 256
        %v971 = vpop.permute.xlu0 %970
        %v972 = vlaneseq
        %v973 = vshrl.u32 %v972, 7
        %v974 = vsub.s32 6, %v973
        %v975 = vrot.slane %v928, %v974
        %977 = vbcast.lane.b32.xlu0 %v975, 256
        %v978 = vpop.permute.xlu0 %977
        %v979 = vlaneseq
        %v980 = vshrl.u32 %v979, 7
        %v981 = vsub.s32 7, %v980
        %v982 = vrot.slane %v928, %v981
        %984 = vbcast.lane.b32.xlu0 %v982, 256
        %v985 = vpop.permute.xlu0 %984
        %v994 = vmul.f32 %v920, %v936
        %v995 = vmul.f32 %v921, %v943
        %v996 = vmul.f32 %v922, %v950
        %v997 = vmul.f32 %v923, %v957
        %v998 = vmul.f32 %v924, %v964
        %v999 = vmul.f32 %v925, %v971
        %v1000 = vmul.f32 %v926, %v978
        %v1001 = vmul.f32 %v927, %v985
        %v1002 = vld [vmem:[#allocation3] sm:$0xff]
        %1004 = vset.pattern.permute.xlu0 0
        %1005 = vperm.xlu0 %1004, %v994
        %v1006 = vpop.permute.xlu0 %1005
        %1009 = vset.pattern.permute.xlu0 0
        %1010 = vperm.xlu0 %1009, %v995
        %v1011 = vpop.permute.xlu0 %1010
        %1014 = vset.pattern.permute.xlu0 0
        %1015 = vperm.xlu0 %1014, %v996
        %v1016 = vpop.permute.xlu0 %1015
        %1019 = vset.pattern.permute.xlu0 0
        %1020 = vperm.xlu0 %1019, %v997
        %v1021 = vpop.permute.xlu0 %1020
        %1024 = vset.pattern.permute.xlu0 0
        %1025 = vperm.xlu0 %1024, %v998
        %v1026 = vpop.permute.xlu0 %1025
        %1029 = vset.pattern.permute.xlu0 0
        %1030 = vperm.xlu0 %1029, %v999
        %v1031 = vpop.permute.xlu0 %1030
        %1034 = vset.pattern.permute.xlu0 0
        %1035 = vperm.xlu0 %1034, %v1000
        %v1036 = vpop.permute.xlu0 %1035
        %1039 = vset.pattern.permute.xlu0 0
        %1040 = vperm.xlu0 %1039, %v1001
        %v1041 = vpop.permute.xlu0 %1040
        %v1043 = vmul.f32 %v1006, %v471
        %v1044 = vmul.f32 %v1011, %v472
        %v1045 = vmul.f32 %v1016, %v473
        %v1046 = vmul.f32 %v1021, %v474
        %v1047 = vmul.f32 %v1026, %v475
        %v1048 = vmul.f32 %v1031, %v476
        %v1049 = vmul.f32 %v1036, %v477
        %v1050 = vmul.f32 %v1041, %v478
        %v1051 = vsel %vm610, %v1043, 0.0
        %v1052 = vrot.slane %v1051, 4
        %v1053 = vadd.f32 %v1051, %v1052
        %v1054 = vrot.slane %v1053, 2
        %v1055 = vadd.f32 %v1053, %v1054
        %v1056 = vrot.slane %v1055, 1
        %v1057 = vadd.f32 %v1055, %v1056
        %v1058 = vsel %vm610, %v1044, 0.0
        %v1059 = vrot.slane %v1058, 4
        %v1060 = vadd.f32 %v1058, %v1059
        %v1061 = vrot.slane %v1060, 2
        %v1062 = vadd.f32 %v1060, %v1061
        %v1063 = vrot.slane %v1062, 1
        %v1064 = vadd.f32 %v1062, %v1063
        %v1065 = vsel %vm610, %v1045, 0.0
        %v1066 = vrot.slane %v1065, 4
        %v1067 = vadd.f32 %v1065, %v1066
        %v1068 = vrot.slane %v1067, 2
        %v1069 = vadd.f32 %v1067, %v1068
        %v1070 = vrot.slane %v1069, 1
        %v1071 = vadd.f32 %v1069, %v1070
        %v1072 = vsel %vm610, %v1046, 0.0
        %v1073 = vrot.slane %v1072, 4
        %v1074 = vadd.f32 %v1072, %v1073
        %v1075 = vrot.slane %v1074, 2
        %v1076 = vadd.f32 %v1074, %v1075
        %v1077 = vrot.slane %v1076, 1
        %v1078 = vadd.f32 %v1076, %v1077
        %v1079 = vsel %vm610, %v1047, 0.0
        %v1080 = vrot.slane %v1079, 4
        %v1081 = vadd.f32 %v1079, %v1080
        %v1082 = vrot.slane %v1081, 2
        %v1083 = vadd.f32 %v1081, %v1082
        %v1084 = vrot.slane %v1083, 1
        %v1085 = vadd.f32 %v1083, %v1084
        %v1086 = vsel %vm610, %v1048, 0.0
        %v1087 = vrot.slane %v1086, 4
        %v1088 = vadd.f32 %v1086, %v1087
        %v1089 = vrot.slane %v1088, 2
        %v1090 = vadd.f32 %v1088, %v1089
        %v1091 = vrot.slane %v1090, 1
        %v1092 = vadd.f32 %v1090, %v1091
        %v1093 = vsel %vm610, %v1049, 0.0
        %v1094 = vrot.slane %v1093, 4
        %v1095 = vadd.f32 %v1093, %v1094
        %v1096 = vrot.slane %v1095, 2
        %v1097 = vadd.f32 %v1095, %v1096
        %v1098 = vrot.slane %v1097, 1
        %v1099 = vadd.f32 %v1097, %v1098
        %v1100 = vsel %vm610, %v1050, 0.0
        %v1101 = vrot.slane %v1100, 4
        %v1102 = vadd.f32 %v1100, %v1101
        %v1103 = vrot.slane %v1102, 2
        %v1104 = vadd.f32 %v1102, %v1103
        %v1105 = vrot.slane %v1104, 1
        %v1106 = vadd.f32 %v1104, %v1105
        %vm1115 = vcmask 1041409
        %v1116 = vsel %vm1115, %v1064, %v1057
        %vm1117 = vcmask 1042434
        %v1118 = vsel %vm1117, %v1071, %v1116
        %vm1119 = vcmask 1043459
        %v1120 = vsel %vm1119, %v1078, %v1118
        %vm1121 = vcmask 1044484
        %v1122 = vsel %vm1121, %v1085, %v1120
        %vm1123 = vcmask 1045509
        %v1124 = vsel %vm1123, %v1092, %v1122
        %vm1125 = vcmask 1046534
        %v1126 = vsel %vm1125, %v1099, %v1124
        %vm1127 = vcmask 1047559
        %v1128 = vsel %vm1127, %v1106, %v1126
        %v1130 = vadd.f32 %v1002, %v1128
        %1131 = vst.msk [vmem:[#allocation3] sm:$0xff] %vm610, %v1130
        // Predicated region
        $region61: #{tpu_custom_call.1} parent=51 // pred_check
          %p1132 = pneg %p386
        $region62: #{tpu_custom_call.1} parent=51 // pred_check_branch
          %1134 = sbr.rel (%p1132) target = $region64
        $region63: #{tpu_custom_call.1} parent=51 // pred_region
          %v1135 = vld [vmem:[#allocation3] sm:$0xff]
          %1136 = vst.msk [vmem:[%s373] sm:$0xff] %vm610, %v1135
        $region64: #{tpu_custom_call.1} parent=51 // pred_fallthru
          _
        %s1137 = sand.u32 %s233, 1
        %s1138 = scalar_lea.sflag [#allocation7], %s1137
        %s1139 = sand.u32 %s233, 1
        %s1140 = smul.addr %s1139, 8
        %s1141 = scalar_lea.vmem [#allocation8], %s1140
        // Predicated region
        $region65: #{tpu_custom_call.1} parent=51 // pred_check
          %p1142 = pneg %p243
        $region66: #{tpu_custom_call.1} parent=51 // pred_check_branch
          %1144 = sbr.rel (%p1142) target = $region68
        $region67: #{tpu_custom_call.1} parent=51 // pred_region
          %s1146 = ssub.s32 128, 128
          %1147 = vsyncadd %s1138, %s1146
          %s1148 = smul.addr %s30, 128
          %s1149 = scalar_lea.hbm %s8, %s1148
          %s1151 = sshll.u32 %s1141, 4
          %s1152 = int_to_ptr.vmem [resolvable:$true] %s1151
          %1154 = dma.vmem_to_hbm [thread:$0]  %s1152, 128, %s1149, %s1138
        $region68: #{tpu_custom_call.1} parent=51 // pred_fallthru
          _
      $region52: #{tpu_custom_call.1} parent=5 // pred_fallthru
        _
      %p1155 = scmp.le.s32.totalorder 2, %s21
      // Predicated region
      $region69: #{tpu_custom_call.1} parent=5 // pred_check
        %p1156 = pneg %p1155
      $region70: #{tpu_custom_call.1} parent=5 // pred_check_branch
        %1158 = sbr.rel (%p1156) target = $region72
      $region71: #{tpu_custom_call.1} parent=5 // pred_region
        %s1159 = ssub.s32 %s21, 2
        // Predicated region
        $region73: #{tpu_custom_call.1} parent=71 // pred_check
          %p1160 = pneg %p249
        $region74: #{tpu_custom_call.1} parent=71 // pred_check_branch
          %1162 = sbr.rel (%p1160) target = $region76
        $region75: #{tpu_custom_call.1} parent=71 // pred_region
          %s1163 = sand.u32 %s234, 1
          %s1164 = scalar_lea.sflag [#allocation7], %s1163
          %s1165 = sand.u32 %s234, 1
          %s1166 = smul.addr %s1165, 8
          %s1167 = scalar_lea.vmem [#allocation8], %s1166
          %1168 = dma.done %s1164, 128
        $region76: #{tpu_custom_call.1} parent=71 // pred_fallthru
          _
      $region72: #{tpu_custom_call.1} parent=5 // pred_fallthru
        _
    $region6: #{tpu_custom_call.1} parent=1 // loop_footer
      %s25 = sadd.s32 1, %s21
    $region7: #{tpu_custom_call.1} parent=1 // loop_footer_branch
      %20 = sbr.rel target = $region3
    $region8: #{tpu_custom_call.1} parent=1 // loop_exit
      _
    %1169 = vsyncpa [#allocation6], 1
    %s1170 = scalar_lea.sflag [#allocation6], 1
    %1171 = vsyncpa %s1170, 1
    %1172 = vsyncpa [#allocation7], 1
    %s1173 = scalar_lea.sflag [#allocation7], 1
    %1174 = vsyncpa %s1173, 1

</llo_original>
